<compile_context>
chip_gen: v5e
topology: v5e:2x2
jax: 0.10.0
libtpu: 0.0.40
codegen_flags: <defaults>
</compile_context>

<pallas_src>
import jax
import jax.numpy as jnp
from jax.experimental import pallas as pl
from jax.experimental.pallas import tpu as pltpu


# ---------------------------------------------------------------------------
# Kernel 1: fused VelDecoderCell    out = hu @ Wu + hl @ Wl + b
# (bf16 matmuls on the MXU, f32 accumulation + bias add)
# ---------------------------------------------------------------------------
def fused_cell_kernel(hu_ref, hl_ref, wu_ref, wl_ref, b_ref, out_ref):
    hu = hu_ref[...].astype(jnp.bfloat16)          # in-kernel cast (VPU slack)
    hl = hl_ref[...].astype(jnp.bfloat16)
    acc = jnp.dot(hu, wu_ref[...], preferred_element_type=jnp.float32)
    acc = acc + jnp.dot(hl, wl_ref[...], preferred_element_type=jnp.float32)
    out_ref[...] = (acc + b_ref[...]).astype(out_ref.dtype)


def vel_decoder_cell(h_upper, h_lower, wu, wl, b, *, out_dtype=jnp.float32):
    """One VelDecoderCell forward. wu/wl should be pre-cast bf16 constants."""
    B, h3 = h_upper.shape
    n = wu.shape[1]                                 # 64 real output columns
    assert h3 % 128 == 0
    if wu.dtype != jnp.bfloat16:                    # no-op when pre-cast
        wu = wu.astype(jnp.bfloat16)
    if wl.dtype != jnp.bfloat16:
        wl = wl.astype(jnp.bfloat16)
    if b.ndim == 1:
        b = b.reshape(1, n)
    b = b.astype(jnp.float32)

    # Grid selection (perf review): one full-batch step for small batches and
    # single-TC chips; two >=128-row parallel steps only when the batch can
    # feed both v7x TensorCores.
    if B >= 256 and B % 16 == 0:
        tb = B // 2
    else:
        tb = B
    grid = (B // tb,)

    act_spec = pl.BlockSpec((tb, h3), lambda i: (i, 0))
    w_spec = pl.BlockSpec((h3, n), lambda i: (0, 0))
    b_spec = pl.BlockSpec((1, n), lambda i: (0, 0))
    out_spec = pl.BlockSpec((tb, n), lambda i: (i, 0))

    return pl.pallas_call(
        fused_cell_kernel,
        out_shape=jax.ShapeDtypeStruct((B, n), out_dtype),
        grid_spec=pltpu.PrefetchScalarGridSpec(
            num_scalar_prefetch=0,
            grid=grid,
            in_specs=[act_spec, act_spec, w_spec, w_spec, b_spec],
            out_specs=out_spec,
        ),
        compiler_params=pltpu.CompilerParams(
            dimension_semantics=("parallel",)),
    )(h_upper, h_lower, wu, wl, b)


# ---------------------------------------------------------------------------
# Kernel 2: the whole VelDecoder.sample() time loop in one pallas_call.
# grid=(T,), weights VMEM-resident, h_upper/h_lower/x carried in VMEM scratch.
# ---------------------------------------------------------------------------
def vel_decoder_sample_kernel(h0u_ref, h0l_ref, x0_ref,
                              wihu_ref, whhu_ref, bihu_ref, bhhu_ref,
                              wihl_ref, whhl_ref, bihl_ref, bhhl_ref,
                              wcu_ref, wcl_ref, bc_ref,
                              y_ref,
                              hu_s, hl_s, x_s):
    t = pl.program_id(0)
    h3 = hu_s.shape[1]

    @pl.when(t == 0)
    def _():
        hu_s[...] = h0u_ref[...]
        hl_s[...] = h0l_ref[...]
        x_s[...] = x0_ref[...]

    def sigmoid(v):                                  # EUP exp + VPU
        return 1.0 / (1.0 + jnp.exp(-v))

    x_bf = x_s[...].astype(jnp.bfloat16)             # shared by both GRUCells

    def gru_step(h_ref, wih_ref, whh_ref, bih_ref, bhh_ref):
        # PyTorch nn.GRUCell semantics (gate order r, z, n).
        h = h_ref[...]
        gi = jnp.dot(x_bf, wih_ref[...],
                     preferred_element_type=jnp.float32) + bih_ref[...]
        gh = jnp.dot(h.astype(jnp.bfloat16), whh_ref[...],
                     preferred_element_type=jnp.float32) + bhh_ref[...]
        r = sigmoid(gi[:, :h3] + gh[:, :h3])
        z = sigmoid(gi[:, h3:2 * h3] + gh[:, h3:2 * h3])
        n = jnp.tanh(gi[:, 2 * h3:] + r * gh[:, 2 * h3:])
        return (1.0 - z) * n + z * h

    hu = gru_step(hu_s, wihu_ref, whhu_ref, bihu_ref, bhhu_ref)
    hl = gru_step(hl_s, wihl_ref, whhl_ref, bihl_ref, bhhl_ref)
    hu_s[...] = hu
    hl_s[...] = hl

    # Fused VelDecoderCell:  tp = hu @ Wu + hl @ Wl + b
    tp = jnp.dot(hu.astype(jnp.bfloat16), wcu_ref[...],
                 preferred_element_type=jnp.float32)
    tp = tp + jnp.dot(hl.astype(jnp.bfloat16), wcl_ref[...],
                      preferred_element_type=jnp.float32)
    tp = tp + bc_ref[...]

    x_new = x_s[...] + tp                            # x = pred + x
    x_s[...] = x_new
    y_ref[0] = x_new.astype(y_ref.dtype)


def vel_decoder_sample(h0_u, h0_l, x0, w, *, time_steps):
    """Fused VelDecoder.sample(); returns time-major (T, B, 64)."""
    B, h3 = h0_u.shape
    D = x0.shape[1]
    G = 3 * h3
    assert B % 8 == 0 and h3 % 128 == 0 and G % 128 == 0

    def const_spec(shape):
        nd = len(shape)
        return pl.BlockSpec(shape, lambda t, _nd=nd: (0,) * _nd)

    in_specs = [
        const_spec((B, h3)), const_spec((B, h3)), const_spec((B, D)),
        const_spec((D, G)), const_spec((h3, G)),
        const_spec((1, G)), const_spec((1, G)),
        const_spec((D, G)), const_spec((h3, G)),
        const_spec((1, G)), const_spec((1, G)),
        const_spec((h3, D)), const_spec((h3, D)), const_spec((1, D)),
    ]
    out_specs = pl.BlockSpec((1, B, D), lambda t: (t, 0, 0))

    return pl.pallas_call(
        vel_decoder_sample_kernel,
        out_shape=jax.ShapeDtypeStruct((time_steps, B, D), jnp.float32),
        grid_spec=pltpu.PrefetchScalarGridSpec(
            num_scalar_prefetch=0,
            grid=(time_steps,),
            in_specs=in_specs,
            out_specs=out_specs,
            scratch_shapes=[pltpu.VMEM((B, h3), jnp.float32),
                            pltpu.VMEM((B, h3), jnp.float32),
                            pltpu.VMEM((B, D), jnp.float32)],
        ),
        compiler_params=pltpu.CompilerParams(
            dimension_semantics=("arbitrary",)),     # sequential recurrence
    )(h0_u, h0_l, x0,
      w["wihu"], w["whhu"], w["bihu"], w["bhhu"],
      w["wihl"], w["whhl"], w["bihl"], w["bhhl"],
      w["wcu"], w["wcl"], w["bc"])


# ---------------------------------------------------------------------------
# Host-side affine composition of VelDecoderCell into (Wu, Wl, b), f32.
# Weights stored (in, out) — pre-transposed from PyTorch's (out, in).
# ---------------------------------------------------------------------------
def fuse_vel_decoder_cell(p, h1, h2, h3):
    def compose(A, c, W, b):
        # (x @ A + c) @ W + b  ==  x @ (A @ W) + (c @ W + b)
        return A @ W, c @ W + b

    # upper stream (h_upper)
    A3u, c3u = p["w3a"], p["b3a"]
    A_ra2, c_ra2 = compose(A3u[:, :h2], c3u[:h2], p["w2ra"], p["b2ra"])
    A_la2, c_la2 = compose(A3u[:, h2:], c3u[h2:], p["w2la"], p["b2la"])
    A_ra1, c_ra1 = compose(A_ra2[:, :h1], c_ra2[:h1], p["w1ra"], p["b1ra"])
    A_t1, c_t1 = compose(A_ra2[:, h1:], c_ra2[h1:], p["w1t"], p["b1t"])
    A_la1, c_la1 = compose(A_la2[:, :h1], c_la2[:h1], p["w1la"], p["b1la"])
    A_t2, c_t2 = compose(A_la2[:, h1:], c_la2[h1:], p["w1t"], p["b1t"])

    # lower stream (h_lower)
    A3l, c3l = p["w3l"], p["b3l"]
    A_rl2, c_rl2 = compose(A3l[:, :h2], c3l[:h2], p["w2rl"], p["b2rl"])
    A_ll2, c_ll2 = compose(A3l[:, h2:], c3l[h2:], p["w2ll"], p["b2ll"])
    A_rl1, c_rl1 = compose(A_rl2[:, :h1], c_rl2[:h1], p["w1rl"], p["b1rl"])
    A_t3, c_t3 = compose(A_rl2[:, h1:], c_rl2[h1:], p["w1t"], p["b1t"])
    A_ll1, c_ll1 = compose(A_ll2[:, :h1], c_ll2[:h1], p["w1ll"], p["b1ll"])
    A_t4, c_t4 = compose(A_ll2[:, h1:], c_ll2[h1:], p["w1t"], p["b1t"])

    # torso = mean of the four shared-torso-decoder applications
    A_tu = 0.25 * (A_t1 + A_t2)               # upper-stream torso contribution
    A_tl = 0.25 * (A_t3 + A_t4)               # lower-stream torso contribution
    c_t = 0.25 * (c_t1 + c_t2 + c_t3 + c_t4)

    # output ordering: [torso[:13], la1(9), ra1(9), ll1(15), rl1(15), torso[13:]]
    z9 = jnp.zeros((h3, 9), jnp.float32)
    z15 = jnp.zeros((h3, 15), jnp.float32)
    Wu = jnp.concatenate([A_tu[:, :13], A_la1, A_ra1, z15, z15, A_tu[:, 13:]],
                         axis=1)              # (h3, 64)
    Wl = jnp.concatenate([A_tl[:, :13], z9, z9, A_ll1, A_rl1, A_tl[:, 13:]],
                         axis=1)              # (h3, 64)
    b = jnp.concatenate([c_t[:13], c_la1, c_ra1, c_ll1, c_rl1, c_t[13:]],
                        axis=0)               # (64,)
    return Wu, Wl, b


# ---------------------------------------------------------------------------
# Host-side prep for the fused sample() kernel:
# fold the x-column selections into the GRU input weights, cast once to bf16.
# ---------------------------------------------------------------------------
UPPER_COLS = tuple(range(31)) + (61, 62, 63)            # x_upper columns of x
LOWER_COLS = tuple(range(13)) + tuple(range(31, 64))    # x_lower columns of x


def scatter_rows(w, cols, total_rows):
    out = jnp.zeros((total_rows, w.shape[1]), w.dtype)
    return out.at[jnp.asarray(cols)].set(w)             # exact (no matmul)


def prepare_sample_weights(gru_p, wu32, wl32, bc, pose_dim=64):
    return dict(
        wihu=scatter_rows(gru_p["wih_u"], UPPER_COLS, pose_dim).astype(jnp.bfloat16),
        whhu=gru_p["whh_u"].astype(jnp.bfloat16),
        bihu=gru_p["bih_u"].reshape(1, -1).astype(jnp.float32),
        bhhu=gru_p["bhh_u"].reshape(1, -1).astype(jnp.float32),
        wihl=scatter_rows(gru_p["wih_l"], LOWER_COLS, pose_dim).astype(jnp.bfloat16),
        whhl=gru_p["whh_l"].astype(jnp.bfloat16),
        bihl=gru_p["bih_l"].reshape(1, -1).astype(jnp.float32),
        bhhl=gru_p["bhh_l"].reshape(1, -1).astype(jnp.float32),
        wcu=wu32.astype(jnp.bfloat16),
        wcl=wl32.astype(jnp.bfloat16),
        bc=bc.reshape(1, -1).astype(jnp.float32),
    )


# ---------------------------------------------------------------------------
# Pure-JAX references (mirror the PyTorch modules exactly, f32)
# ---------------------------------------------------------------------------
def ref_forward(hu, hl, p):
    """VelDecoderCell.forward, layer by layer."""
    def lin(x, w, b):
        return x @ w + b

    upper = lin(hu, p["w3a"], p["b3a"])
    lower = lin(hl, p["w3l"], p["b3l"])
    h2 = upper.shape[-1] // 2
    ra2 = lin(upper[..., :h2], p["w2ra"], p["b2ra"])
    la2 = lin(upper[..., -h2:], p["w2la"], p["b2la"])
    rl2 = lin(lower[..., :h2], p["w2rl"], p["b2rl"])
    ll2 = lin(lower[..., -h2:], p["w2ll"], p["b2ll"])
    h1 = ra2.shape[-1] // 2
    ra1 = lin(ra2[..., :h1], p["w1ra"], p["b1ra"])
    t1 = lin(ra2[..., -h1:], p["w1t"], p["b1t"])
    la1 = lin(la2[..., :h1], p["w1la"], p["b1la"])
    t2 = lin(la2[..., -h1:], p["w1t"], p["b1t"])
    rl1 = lin(rl2[..., :h1], p["w1rl"], p["b1rl"])
    t3 = lin(rl2[..., -h1:], p["w1t"], p["b1t"])
    ll1 = lin(ll2[..., :h1], p["w1ll"], p["b1ll"])
    t4 = lin(ll2[..., -h1:], p["w1t"], p["b1t"])
    torso = (t1 + t2 + t3 + t4) / 4.0
    return jnp.concatenate(
        [torso[..., :13], la1, ra1, ll1, rl1, torso[..., -3:]], axis=-1)


def _gru_cell_ref(x, h, wih, whh, bih, bhh):
    gi = x @ wih + bih
    gh = h @ whh + bhh
    H = h.shape[-1]
    r = jax.nn.sigmoid(gi[..., :H] + gh[..., :H])
    z = jax.nn.sigmoid(gi[..., H:2 * H] + gh[..., H:2 * H])
    n = jnp.tanh(gi[..., 2 * H:] + r * gh[..., 2 * H:])
    return (1.0 - z) * n + z * h


def ref_vel_decoder_sample(cell_p, gru_p, h_u, h_l, x0, time_steps):
    """Exact f32 mirror of PyTorch VelDecoder.sample() (time-major output)."""
    x = x0
    ys = []
    for _ in range(time_steps):
        x_upper = jnp.concatenate([x[:, :31], x[:, 61:64]], axis=-1)
        x_lower = jnp.concatenate([x[:, :13], x[:, 31:64]], axis=-1)
        h_u = _gru_cell_ref(x_upper, h_u, gru_p["wih_u"], gru_p["whh_u"],
                            gru_p["bih_u"], gru_p["bhh_u"])
        h_l = _gru_cell_ref(x_lower, h_l, gru_p["wih_l"], gru_p["whh_l"],
                            gru_p["bih_l"], gru_p["bhh_l"])
        x = ref_forward(h_u, h_l, cell_p) + x
        ys.append(x)
    return jnp.stack(ys, axis=0)                  # (T, B, 64)


def ref_vel_decoder_sample_bf16(w, h_u, h_l, x0, time_steps):
    """Mirror of the Pallas sample kernel with identical bf16 cast points."""
    bf = lambda a: a.astype(jnp.bfloat16).astype(jnp.float32)
    up = lambda a: a.astype(jnp.float32)
    x = x0
    ys = []
    for _ in range(time_steps):
        x_bf = bf(x)

        def gru(h, wih, whh, bih, bhh):
            gi = x_bf @ up(wih) + bih
            gh = bf(h) @ up(whh) + bhh
            H = h.shape[-1]
            r = jax.nn.sigmoid(gi[:, :H] + gh[:, :H])
            z = jax.nn.sigmoid(gi[:, H:2 * H] + gh[:, H:2 * H])
            n = jnp.tanh(gi[:, 2 * H:] + r * gh[:, 2 * H:])
            return (1.0 - z) * n + z * h

        h_u = gru(h_u, w["wihu"], w["whhu"], w["bihu"], w["bhhu"])
        h_l = gru(h_l, w["wihl"], w["whhl"], w["bihl"], w["bhhl"])
        tp = bf(h_u) @ up(w["wcu"]) + bf(h_l) @ up(w["wcl"]) + w["bc"]
        x = x + tp
        ys.append(x)
    return jnp.stack(ys, axis=0)


# ---------------------------------------------------------------------------
# Deterministic parameter construction ((in, out) layout, biases (out,))
# ---------------------------------------------------------------------------
def make_params(key, h1, h2, h3, scale=0.1):
    dims = [
        ("3a", h3, 2 * h2), ("3l", h3, 2 * h2),
        ("2ra", h2, 2 * h1), ("2la", h2, 2 * h1),
        ("2rl", h2, 2 * h1), ("2ll", h2, 2 * h1),
        ("1ra", h1, 9), ("1la", h1, 9),
        ("1rl", h1, 15), ("1ll", h1, 15),
        ("1t", h1, 16),
    ]
    keys = jax.random.split(key, len(dims))
    p = {}
    for k, (name, din, dout) in zip(keys, dims):
        kw, kb = jax.random.split(k)
        p["w" + name] = jax.random.normal(kw, (din, dout), jnp.float32) * scale
        p["b" + name] = jax.random.normal(kb, (dout,), jnp.float32) * scale
    return p


def make_gru_params(key, h3, scale=0.1):
    specs = [("u", 34), ("l", 46)]                 # rnn_upper / rnn_lower inputs
    keys = jax.random.split(key, len(specs))
    g = {}
    for k, (name, din) in zip(keys, specs):
        k1, k2, k3, k4 = jax.random.split(k, 4)
        g["wih_" + name] = jax.random.normal(k1, (din, 3 * h3), jnp.float32) * scale
        g["whh_" + name] = jax.random.normal(k2, (h3, 3 * h3), jnp.float32) * scale
        g["bih_" + name] = jax.random.normal(k3, (3 * h3,), jnp.float32) * scale
        g["bhh_" + name] = jax.random.normal(k4, (3 * h3,), jnp.float32) * scale
    return g


# ---------------------------------------------------------------------------
if __name__ == "__main__":
    # PoseGenerator hard-codes h1=32, h2=128, h3=512; the decoded pose is 64-d.
    h1, h2, h3 = 32, 128, 512
    out_dim = 64                        # 13 + 9 + 9 + 15 + 15 + 3
    B, T = 16, 8                        # small demo shapes

    root = jax.random.PRNGKey(0)
    k_cell, k_gru, k_hu, k_hl, k_x = jax.random.split(root, 5)
    cell_p = make_params(k_cell, h1, h2, h3)
    gru_p = make_gru_params(k_gru, h3)
    h0_u = jax.random.normal(k_hu, (B, h3), jnp.float32) * 0.5
    h0_l = jax.random.normal(k_hl, (B, h3), jnp.float32) * 0.5
    x0 = jax.random.normal(k_x, (B, out_dim), jnp.float32) * 0.25

    # ---- host-side composition of VelDecoderCell + exactness check (f32) ----
    with jax.default_matmul_precision("highest"):
        wu32, wl32, bc = fuse_vel_decoder_cell(cell_p, h1, h2, h3)
        cell_ref = ref_forward(h0_u, h0_l, cell_p)
        cell_fused_f32 = h0_u @ wu32 + h0_l @ wl32 + bc
    fuse_err = float(jnp.max(jnp.abs(cell_fused_f32 - cell_ref)))
    assert fuse_err < 1e-3, fuse_err

    # Weights are constants: cast to bf16 exactly ONCE (perf-review item).
    wu_bf = wu32.astype(jnp.bfloat16)
    wl_bf = wl32.astype(jnp.bfloat16)

    # ---- kernel 1: single VelDecoderCell call ----
    pred_cell = vel_decoder_cell(h0_u, h0_l, wu_bf, wl_bf, bc)
    pred_cell = jax.block_until_ready(pred_cell)
    assert pred_cell.shape == (B, out_dim)
    with jax.default_matmul_precision("highest"):
        bf = lambda a: a.astype(jnp.bfloat16).astype(jnp.float32)
        cell_bf_ref = bf(h0_u) @ bf(wu32) + bf(h0_l) @ bf(wl32) + bc
    cell_err = float(jnp.max(jnp.abs(pred_cell - cell_bf_ref)))
    assert cell_err < 2e-2, cell_err
    # Sanity vs. the exact layer-by-layer f32 cell (bf16 quantization drift).
    cell_drift = float(jnp.max(jnp.abs(pred_cell - cell_ref)))
    assert cell_drift < 0.05 * float(jnp.max(jnp.abs(cell_ref))) + 0.05, cell_drift

    # ---- kernel 2: the fused VelDecoder.sample() time loop ----
    w = prepare_sample_weights(gru_p, wu32, wl32, bc, pose_dim=out_dim)
    y = vel_decoder_sample(h0_u, h0_l, x0, w, time_steps=T)
    y = jax.block_until_ready(y)
    assert y.shape == (T, B, out_dim)

    with jax.default_matmul_precision("highest"):
        y_bf_ref = ref_vel_decoder_sample_bf16(w, h0_u, h0_l, x0, T)
        y_f32_ref = ref_vel_decoder_sample(cell_p, gru_p, h0_u, h0_l, x0, T)
    loop_err = float(jnp.max(jnp.abs(y - y_bf_ref)))
    assert loop_err < 2e-2, loop_err
    # bf16 drift vs. the exact f32 recurrence (grows with T; self-scaled bound).
    loop_drift = float(jnp.max(jnp.abs(y - y_f32_ref)))
    assert loop_drift < 0.05 * float(jnp.max(jnp.abs(y_f32_ref))) + 0.05, loop_drift

    print("KERNEL_OK")
</pallas_src>

<mosaic_0001>
module attributes {stable_mosaic.version = 11 : i64} {
  func.func @fused_cell_kernel(%arg0: i32, %arg1: memref<16x512xf32, #tpu.memory_space<vmem>>, %arg2: memref<16x512xf32, #tpu.memory_space<vmem>>, %arg3: memref<512x64xbf16, #tpu.memory_space<vmem>>, %arg4: memref<512x64xbf16, #tpu.memory_space<vmem>>, %arg5: memref<1x64xf32, #tpu.memory_space<vmem>>, %arg6: memref<16x64xf32, #tpu.memory_space<vmem>>) attributes {dimension_semantics = [#tpu.dimension_semantics<parallel>], iteration_bounds = array<i64: 1>, scalar_prefetch = 0 : i64, scratch_operands = 0 : i64, tpu.core_type = #tpu.core_type<tc>, window_params = [{transform_indices = @transform_0, window_bounds = array<i64: 16, 512>}, {transform_indices = @transform_1, window_bounds = array<i64: 16, 512>}, {pipeline_mode = #tpu.pipeline_mode<synchronous>, transform_indices = @transform_2, window_bounds = array<i64: 512, 64>}, {pipeline_mode = #tpu.pipeline_mode<synchronous>, transform_indices = @transform_3, window_bounds = array<i64: 512, 64>}, {pipeline_mode = #tpu.pipeline_mode<synchronous>, transform_indices = @transform_4, window_bounds = array<i64: 1, 64>}, {transform_indices = @transform_5, window_bounds = array<i64: 16, 64>}]} {
    %c0 = arith.constant 0 : index
    %c0_0 = arith.constant 0 : index
    %0 = vector.load %arg1[%c0, %c0_0] : memref<16x512xf32, #tpu.memory_space<vmem>>, vector<16x512xf32>
    %1 = arith.truncf %0 : vector<16x512xf32> to vector<16x512xbf16>
    %c0_1 = arith.constant 0 : index
    %c0_2 = arith.constant 0 : index
    %2 = vector.load %arg2[%c0_1, %c0_2] : memref<16x512xf32, #tpu.memory_space<vmem>>, vector<16x512xf32>
    %3 = arith.truncf %2 : vector<16x512xf32> to vector<16x512xbf16>
    %c0_3 = arith.constant 0 : index
    %c0_4 = arith.constant 0 : index
    %4 = vector.load %arg3[%c0_3, %c0_4] : memref<512x64xbf16, #tpu.memory_space<vmem>>, vector<512x64xbf16>
    %cst = arith.constant dense<0.000000e+00> : vector<16x64xf32>
    %5 = tpu.matmul %1, %4, %cst {dimension_numbers = #tpu.dot_dimension_numbers<[1], [0], [0], [1], [0, 0, 1, 1], [], []>} : vector<16x512xbf16>, vector<512x64xbf16>, vector<16x64xf32> -> vector<16x64xf32>
    %c0_5 = arith.constant 0 : index
    %c0_6 = arith.constant 0 : index
    %6 = vector.load %arg4[%c0_5, %c0_6] : memref<512x64xbf16, #tpu.memory_space<vmem>>, vector<512x64xbf16>
    %cst_7 = arith.constant dense<0.000000e+00> : vector<16x64xf32>
    %7 = tpu.matmul %3, %6, %cst_7 {dimension_numbers = #tpu.dot_dimension_numbers<[1], [0], [0], [1], [0, 0, 1, 1], [], []>} : vector<16x512xbf16>, vector<512x64xbf16>, vector<16x64xf32> -> vector<16x64xf32>
    %8 = arith.addf %5, %7 : vector<16x64xf32>
    %c0_8 = arith.constant 0 : index
    %c0_9 = arith.constant 0 : index
    %9 = vector.load %arg5[%c0_8, %c0_9] : memref<1x64xf32, #tpu.memory_space<vmem>>, vector<1x64xf32>
    %10 = vector.broadcast %9 : vector<1x64xf32> to vector<16x64xf32>
    %11 = arith.addf %8, %10 : vector<16x64xf32>
    %c0_10 = arith.constant 0 : index
    %c0_11 = arith.constant 0 : index
    %12 = vector.load %arg6[%c0_10, %c0_11] : memref<16x64xf32, #tpu.memory_space<vmem>>, vector<16x64xf32>
    tpu.vector_store %arg6[%c0_10, %c0_11], %11 {strides = array<i32>} : memref<16x64xf32, #tpu.memory_space<vmem>>, vector<16x64xf32>,
    return
  }
  func.func @transform_0(%arg0: i32) -> (i32, i32) {
    %c0_i32 = arith.constant 0 : i32
    %c0_i32_0 = arith.constant 0 : i32
    return %arg0, %c0_i32 : i32, i32
  }
  func.func @transform_1(%arg0: i32) -> (i32, i32) {
    %c0_i32 = arith.constant 0 : i32
    %c0_i32_0 = arith.constant 0 : i32
    return %arg0, %c0_i32 : i32, i32
  }
  func.func @transform_2(%arg0: i32) -> (i32, i32) {
    %c0_i32 = arith.constant 0 : i32
    %c0_i32_0 = arith.constant 0 : i32
    %c0_i32_1 = arith.constant 0 : i32
    return %c0_i32, %c0_i32_0 : i32, i32
  }
  func.func @transform_3(%arg0: i32) -> (i32, i32) {
    %c0_i32 = arith.constant 0 : i32
    %c0_i32_0 = arith.constant 0 : i32
    %c0_i32_1 = arith.constant 0 : i32
    return %c0_i32, %c0_i32_0 : i32, i32
  }
  func.func @transform_4(%arg0: i32) -> (i32, i32) {
    %c0_i32 = arith.constant 0 : i32
    %c0_i32_0 = arith.constant 0 : i32
    %c0_i32_1 = arith.constant 0 : i32
    return %c0_i32, %c0_i32_0 : i32, i32
  }
  func.func @transform_5(%arg0: i32) -> (i32, i32) {
    %c0_i32 = arith.constant 0 : i32
    %c0_i32_0 = arith.constant 0 : i32
    return %arg0, %c0_i32 : i32, i32
  }
}

</mosaic_0001>

<llo_original>
// kernel: tpu_custom_call.1
$region0: #{tpu_custom_call.1}
  #allocation0 [shape = 'u32[]', space=smem, size = 0x4, offset = 0x4, fixed_abs, tag = 'smem constant byte address 0x4 - core index']
  #allocation1 [shape = 'u32[72,128]{1,0:T(1,128)}', space=vmem, size = 0x9000, scoped, tag = 'internal scratch']
  %s0 = inlined_call_operand.vmem [shape: f32[16,512], index: 0, kind: input, shape index: {}]
  %s1 = inlined_call_operand.vmem [shape: f32[16,512], index: 1, kind: input, shape index: {}]
  %s2 = inlined_call_operand.vmem [shape: bf16[512,64], index: 2, kind: input, shape index: {}]
  %s3 = inlined_call_operand.vmem [shape: bf16[512,64], index: 3, kind: input, shape index: {}]
  %s4 = inlined_call_operand.vmem [shape: f32[1,64], index: 4, kind: input, shape index: {}]
  %s5 = inlined_call_operand.hbm [shape: f32[16,64], index: 5, kind: output, shape index: {}]
  %s6 = sld [smem:[#allocation0]]
  $region30: #{tpu_custom_call.1} parent=0
    _
  %s8 = ssub.s32 1, %s6
  %s9 = scalar_select 0, %s8, %s6
  $region1: #{tpu_custom_call.1} parent=0
    #allocation2 [shape = 'u8[8192]{0}', space=vmem, size = 0x2000, scoped, tag = 'output window, operand 0, single buffered']
    #allocation3 [shape = 's32[1]{0}', space=sflag, size = 0x4, scoped, tag = 'scoped memory for tpu_custom_call.1']
    %10 = vsyncpa [#allocation3], 0
    // Predicated region
    $region2: #{tpu_custom_call.1} parent=1 // pred_check
      _
    $region3: #{tpu_custom_call.1} parent=1 // pred_check_branch
      %12 = sbr.rel (0) target = $region5
    $region4: #{tpu_custom_call.1} parent=1 // pred_region
      _
    $region5: #{tpu_custom_call.1} parent=1 // pred_fallthru
      _
    // Predicated region
    $region6: #{tpu_custom_call.1} parent=1 // pred_check
      _
    $region7: #{tpu_custom_call.1} parent=1 // pred_check_branch
      %14 = sbr.rel (0) target = $region9
    $region8: #{tpu_custom_call.1} parent=1 // pred_region
      _
    $region9: #{tpu_custom_call.1} parent=1 // pred_fallthru
      _
    // Predicated region
    $region10: #{tpu_custom_call.1} parent=1 // pred_check
      _
    $region11: #{tpu_custom_call.1} parent=1 // pred_check_branch
      %16 = sbr.rel (0) target = $region13
    $region12: #{tpu_custom_call.1} parent=1 // pred_region
      _
    $region13: #{tpu_custom_call.1} parent=1 // pred_fallthru
      _
    // Predicated region
    $region14: #{tpu_custom_call.1} parent=1 // pred_check
      _
    $region15: #{tpu_custom_call.1} parent=1 // pred_check_branch
      %18 = sbr.rel (0) target = $region17
    $region16: #{tpu_custom_call.1} parent=1 // pred_region
      _
    $region17: #{tpu_custom_call.1} parent=1 // pred_fallthru
      _
    // Predicated region
    $region18: #{tpu_custom_call.1} parent=1 // pred_check
      _
    $region19: #{tpu_custom_call.1} parent=1 // pred_check_branch
      %20 = sbr.rel (0) target = $region21
    $region20: #{tpu_custom_call.1} parent=1 // pred_region
      _
    $region21: #{tpu_custom_call.1} parent=1 // pred_fallthru
      _
    %v21 = vld [vmem:[%s0] sm:$0xff]
    %v22 = vld [vmem:[%s0 + $0x8] sm:$0xff]
    %v23 = vld [vmem:[%s0 + $0x10] sm:$0xff]
    %v24 = vld [vmem:[%s0 + $0x18] sm:$0xff]
    %v25 = vld [vmem:[%s0 + $0x20] sm:$0xff]
    %v26 = vld [vmem:[%s0 + $0x28] sm:$0xff]
    %v27 = vld [vmem:[%s0 + $0x30] sm:$0xff]
    %v28 = vld [vmem:[%s0 + $0x38] sm:$0xff]
    %v29 = vpack.c.bf16 %v25, %v21
    %v30 = vpack.c.bf16 %v26, %v22
    %v31 = vpack.c.bf16 %v27, %v23
    %v32 = vpack.c.bf16 %v28, %v24
    %v33 = vld [vmem:[%s1] sm:$0xff]
    %v34 = vld [vmem:[%s1 + $0x8] sm:$0xff]
    %v35 = vld [vmem:[%s1 + $0x10] sm:$0xff]
    %v36 = vld [vmem:[%s1 + $0x18] sm:$0xff]
    %v37 = vld [vmem:[%s1 + $0x20] sm:$0xff]
    %v38 = vld [vmem:[%s1 + $0x28] sm:$0xff]
    %v39 = vld [vmem:[%s1 + $0x30] sm:$0xff]
    %v40 = vld [vmem:[%s1 + $0x38] sm:$0xff]
    %v41 = vpack.c.bf16 %v37, %v33
    %v42 = vpack.c.bf16 %v38, %v34
    %v43 = vpack.c.bf16 %v39, %v35
    %v44 = vpack.c.bf16 %v40, %v36
    %v45 = vld [vmem:[%s2] sm:$0xf]
    %v46 = vld [vmem:[%s2 + $0x4] sm:$0xf]
    %v47 = vld [vmem:[%s2 + $0x8] sm:$0xf]
    %v48 = vld [vmem:[%s2 + $0xc] sm:$0xf]
    %v49 = vld [vmem:[%s2 + $0x10] sm:$0xf]
    %v50 = vld [vmem:[%s2 + $0x14] sm:$0xf]
    %v51 = vld [vmem:[%s2 + $0x18] sm:$0xf]
    %v52 = vld [vmem:[%s2 + $0x1c] sm:$0xf]
    %v53 = vld [vmem:[%s2 + $0x20] sm:$0xf]
    %v54 = vld [vmem:[%s2 + $0x24] sm:$0xf]
    %v55 = vld [vmem:[%s2 + $0x28] sm:$0xf]
    %v56 = vld [vmem:[%s2 + $0x2c] sm:$0xf]
    %v57 = vld [vmem:[%s2 + $0x30] sm:$0xf]
    %v58 = vld [vmem:[%s2 + $0x34] sm:$0xf]
    %v59 = vld [vmem:[%s2 + $0x38] sm:$0xf]
    %v60 = vld [vmem:[%s2 + $0x3c] sm:$0xf]
    %v61 = vld [vmem:[%s2 + $0x40] sm:$0xf]
    %v62 = vld [vmem:[%s2 + $0x44] sm:$0xf]
    %v63 = vld [vmem:[%s2 + $0x48] sm:$0xf]
    %v64 = vld [vmem:[%s2 + $0x4c] sm:$0xf]
    %v65 = vld [vmem:[%s2 + $0x50] sm:$0xf]
    %v66 = vld [vmem:[%s2 + $0x54] sm:$0xf]
    %v67 = vld [vmem:[%s2 + $0x58] sm:$0xf]
    %v68 = vld [vmem:[%s2 + $0x5c] sm:$0xf]
    %v69 = vld [vmem:[%s2 + $0x60] sm:$0xf]
    %v70 = vld [vmem:[%s2 + $0x64] sm:$0xf]
    %v71 = vld [vmem:[%s2 + $0x68] sm:$0xf]
    %v72 = vld [vmem:[%s2 + $0x6c] sm:$0xf]
    %v73 = vld [vmem:[%s2 + $0x70] sm:$0xf]
    %v74 = vld [vmem:[%s2 + $0x74] sm:$0xf]
    %v75 = vld [vmem:[%s2 + $0x78] sm:$0xf]
    %v76 = vld [vmem:[%s2 + $0x7c] sm:$0xf]
    %v77 = vld [vmem:[%s2 + $0x80] sm:$0xf]
    %v78 = vld [vmem:[%s2 + $0x84] sm:$0xf]
    %v79 = vld [vmem:[%s2 + $0x88] sm:$0xf]
    %v80 = vld [vmem:[%s2 + $0x8c] sm:$0xf]
    %v81 = vld [vmem:[%s2 + $0x90] sm:$0xf]
    %v82 = vld [vmem:[%s2 + $0x94] sm:$0xf]
    %v83 = vld [vmem:[%s2 + $0x98] sm:$0xf]
    %v84 = vld [vmem:[%s2 + $0x9c] sm:$0xf]
    %v85 = vld [vmem:[%s2 + $0xa0] sm:$0xf]
    %v86 = vld [vmem:[%s2 + $0xa4] sm:$0xf]
    %v87 = vld [vmem:[%s2 + $0xa8] sm:$0xf]
    %v88 = vld [vmem:[%s2 + $0xac] sm:$0xf]
    %v89 = vld [vmem:[%s2 + $0xb0] sm:$0xf]
    %v90 = vld [vmem:[%s2 + $0xb4] sm:$0xf]
    %v91 = vld [vmem:[%s2 + $0xb8] sm:$0xf]
    %v92 = vld [vmem:[%s2 + $0xbc] sm:$0xf]
    %v93 = vld [vmem:[%s2 + $0xc0] sm:$0xf]
    %v94 = vld [vmem:[%s2 + $0xc4] sm:$0xf]
    %v95 = vld [vmem:[%s2 + $0xc8] sm:$0xf]
    %v96 = vld [vmem:[%s2 + $0xcc] sm:$0xf]
    %v97 = vld [vmem:[%s2 + $0xd0] sm:$0xf]
    %v98 = vld [vmem:[%s2 + $0xd4] sm:$0xf]
    %v99 = vld [vmem:[%s2 + $0xd8] sm:$0xf]
    %v100 = vld [vmem:[%s2 + $0xdc] sm:$0xf]
    %v101 = vld [vmem:[%s2 + $0xe0] sm:$0xf]
    %v102 = vld [vmem:[%s2 + $0xe4] sm:$0xf]
    %v103 = vld [vmem:[%s2 + $0xe8] sm:$0xf]
    %v104 = vld [vmem:[%s2 + $0xec] sm:$0xf]
    %v105 = vld [vmem:[%s2 + $0xf0] sm:$0xf]
    %v106 = vld [vmem:[%s2 + $0xf4] sm:$0xf]
    %v107 = vld [vmem:[%s2 + $0xf8] sm:$0xf]
    %v108 = vld [vmem:[%s2 + $0xfc] sm:$0xf]
    %v109 = vld [vmem:[%s3] sm:$0xf]
    %v110 = vld [vmem:[%s3 + $0x4] sm:$0xf]
    %v111 = vld [vmem:[%s3 + $0x8] sm:$0xf]
    %v112 = vld [vmem:[%s3 + $0xc] sm:$0xf]
    %v113 = vld [vmem:[%s3 + $0x10] sm:$0xf]
    %v114 = vld [vmem:[%s3 + $0x14] sm:$0xf]
    %v115 = vld [vmem:[%s3 + $0x18] sm:$0xf]
    %v116 = vld [vmem:[%s3 + $0x1c] sm:$0xf]
    %v117 = vld [vmem:[%s3 + $0x20] sm:$0xf]
    %v118 = vld [vmem:[%s3 + $0x24] sm:$0xf]
    %v119 = vld [vmem:[%s3 + $0x28] sm:$0xf]
    %v120 = vld [vmem:[%s3 + $0x2c] sm:$0xf]
    %v121 = vld [vmem:[%s3 + $0x30] sm:$0xf]
    %v122 = vld [vmem:[%s3 + $0x34] sm:$0xf]
    %v123 = vld [vmem:[%s3 + $0x38] sm:$0xf]
    %v124 = vld [vmem:[%s3 + $0x3c] sm:$0xf]
    %v125 = vld [vmem:[%s3 + $0x40] sm:$0xf]
    %v126 = vld [vmem:[%s3 + $0x44] sm:$0xf]
    %v127 = vld [vmem:[%s3 + $0x48] sm:$0xf]
    %v128 = vld [vmem:[%s3 + $0x4c] sm:$0xf]
    %v129 = vld [vmem:[%s3 + $0x50] sm:$0xf]
    %v130 = vld [vmem:[%s3 + $0x54] sm:$0xf]
    %v131 = vld [vmem:[%s3 + $0x58] sm:$0xf]
    %v132 = vld [vmem:[%s3 + $0x5c] sm:$0xf]
    %v133 = vld [vmem:[%s3 + $0x60] sm:$0xf]
    %v134 = vld [vmem:[%s3 + $0x64] sm:$0xf]
    %v135 = vld [vmem:[%s3 + $0x68] sm:$0xf]
    %v136 = vld [vmem:[%s3 + $0x6c] sm:$0xf]
    %v137 = vld [vmem:[%s3 + $0x70] sm:$0xf]
    %v138 = vld [vmem:[%s3 + $0x74] sm:$0xf]
    %v139 = vld [vmem:[%s3 + $0x78] sm:$0xf]
    %v140 = vld [vmem:[%s3 + $0x7c] sm:$0xf]
    %v141 = vld [vmem:[%s3 + $0x80] sm:$0xf]
    %v142 = vld [vmem:[%s3 + $0x84] sm:$0xf]
    %v143 = vld [vmem:[%s3 + $0x88] sm:$0xf]
    %v144 = vld [vmem:[%s3 + $0x8c] sm:$0xf]
    %v145 = vld [vmem:[%s3 + $0x90] sm:$0xf]
    %v146 = vld [vmem:[%s3 + $0x94] sm:$0xf]
    %v147 = vld [vmem:[%s3 + $0x98] sm:$0xf]
    %v148 = vld [vmem:[%s3 + $0x9c] sm:$0xf]
    %v149 = vld [vmem:[%s3 + $0xa0] sm:$0xf]
    %v150 = vld [vmem:[%s3 + $0xa4] sm:$0xf]
    %v151 = vld [vmem:[%s3 + $0xa8] sm:$0xf]
    %v152 = vld [vmem:[%s3 + $0xac] sm:$0xf]
    %v153 = vld [vmem:[%s3 + $0xb0] sm:$0xf]
    %v154 = vld [vmem:[%s3 + $0xb4] sm:$0xf]
    %v155 = vld [vmem:[%s3 + $0xb8] sm:$0xf]
    %v156 = vld [vmem:[%s3 + $0xbc] sm:$0xf]
    %v157 = vld [vmem:[%s3 + $0xc0] sm:$0xf]
    %v158 = vld [vmem:[%s3 + $0xc4] sm:$0xf]
    %v159 = vld [vmem:[%s3 + $0xc8] sm:$0xf]
    %v160 = vld [vmem:[%s3 + $0xcc] sm:$0xf]
    %v161 = vld [vmem:[%s3 + $0xd0] sm:$0xf]
    %v162 = vld [vmem:[%s3 + $0xd4] sm:$0xf]
    %v163 = vld [vmem:[%s3 + $0xd8] sm:$0xf]
    %v164 = vld [vmem:[%s3 + $0xdc] sm:$0xf]
    %v165 = vld [vmem:[%s3 + $0xe0] sm:$0xf]
    %v166 = vld [vmem:[%s3 + $0xe4] sm:$0xf]
    %v167 = vld [vmem:[%s3 + $0xe8] sm:$0xf]
    %v168 = vld [vmem:[%s3 + $0xec] sm:$0xf]
    %v169 = vld [vmem:[%s3 + $0xf0] sm:$0xf]
    %v170 = vld [vmem:[%s3 + $0xf4] sm:$0xf]
    %v171 = vld [vmem:[%s3 + $0xf8] sm:$0xf]
    %v172 = vld [vmem:[%s3 + $0xfc] sm:$0xf]
    %v237 = vunpack.c.l.b16 %v109
    %v238 = vunpack.c.l.b16 %v110
    %v239 = vunpack.c.l.b16 %v111
    %v240 = vunpack.c.l.b16 %v112
    %v241 = vunpack.c.l.b16 %v113
    %v242 = vunpack.c.l.b16 %v114
    %v243 = vunpack.c.l.b16 %v115
    %v244 = vunpack.c.l.b16 %v116
    %v245 = vunpack.c.l.b16 %v117
    %v246 = vunpack.c.l.b16 %v118
    %v247 = vunpack.c.l.b16 %v119
    %v248 = vunpack.c.l.b16 %v120
    %v249 = vunpack.c.l.b16 %v121
    %v250 = vunpack.c.l.b16 %v122
    %v251 = vunpack.c.l.b16 %v123
    %v252 = vunpack.c.l.b16 %v124
    %v253 = vunpack.c.l.b16 %v125
    %v254 = vunpack.c.l.b16 %v126
    %v255 = vunpack.c.l.b16 %v127
    %v256 = vunpack.c.l.b16 %v128
    %v257 = vunpack.c.l.b16 %v129
    %v258 = vunpack.c.l.b16 %v130
    %v259 = vunpack.c.l.b16 %v131
    %v260 = vunpack.c.l.b16 %v132
    %v261 = vunpack.c.l.b16 %v133
    %v262 = vunpack.c.l.b16 %v134
    %v263 = vunpack.c.l.b16 %v135
    %v264 = vunpack.c.l.b16 %v136
    %v265 = vunpack.c.l.b16 %v137
    %v266 = vunpack.c.l.b16 %v138
    %v267 = vunpack.c.l.b16 %v139
    %v268 = vunpack.c.l.b16 %v140
    %v269 = vunpack.c.l.b16 %v141
    %v270 = vunpack.c.l.b16 %v142
    %v271 = vunpack.c.l.b16 %v143
    %v272 = vunpack.c.l.b16 %v144
    %v273 = vunpack.c.l.b16 %v145
    %v274 = vunpack.c.l.b16 %v146
    %v275 = vunpack.c.l.b16 %v147
    %v276 = vunpack.c.l.b16 %v148
    %v277 = vunpack.c.l.b16 %v149
    %v278 = vunpack.c.l.b16 %v150
    %v279 = vunpack.c.l.b16 %v151
    %v280 = vunpack.c.l.b16 %v152
    %v281 = vunpack.c.l.b16 %v153
    %v282 = vunpack.c.l.b16 %v154
    %v283 = vunpack.c.l.b16 %v155
    %v284 = vunpack.c.l.b16 %v156
    %v285 = vunpack.c.l.b16 %v157
    %v286 = vunpack.c.l.b16 %v158
    %v287 = vunpack.c.l.b16 %v159
    %v288 = vunpack.c.l.b16 %v160
    %v289 = vunpack.c.l.b16 %v161
    %v290 = vunpack.c.l.b16 %v162
    %v291 = vunpack.c.l.b16 %v163
    %v292 = vunpack.c.l.b16 %v164
    %v293 = vunpack.c.l.b16 %v165
    %v294 = vunpack.c.l.b16 %v166
    %v295 = vunpack.c.l.b16 %v167
    %v296 = vunpack.c.l.b16 %v168
    %v297 = vunpack.c.l.b16 %v169
    %v298 = vunpack.c.l.b16 %v170
    %v299 = vunpack.c.l.b16 %v171
    %v300 = vunpack.c.l.b16 %v172
    %v301 = vpack.c.b16 %v238, %v237
    %v302 = vpack.c.b16 %v240, %v239
    %v303 = vpack.c.b16 %v242, %v241
    %v304 = vpack.c.b16 %v244, %v243
    %v305 = vpack.c.b16 %v246, %v245
    %v306 = vpack.c.b16 %v248, %v247
    %v307 = vpack.c.b16 %v250, %v249
    %v308 = vpack.c.b16 %v252, %v251
    %v309 = vpack.c.b16 %v254, %v253
    %v310 = vpack.c.b16 %v256, %v255
    %v311 = vpack.c.b16 %v258, %v257
    %v312 = vpack.c.b16 %v260, %v259
    %v313 = vpack.c.b16 %v262, %v261
    %v314 = vpack.c.b16 %v264, %v263
    %v315 = vpack.c.b16 %v266, %v265
    %v316 = vpack.c.b16 %v268, %v267
    %v317 = vpack.c.b16 %v270, %v269
    %v318 = vpack.c.b16 %v272, %v271
    %v319 = vpack.c.b16 %v274, %v273
    %v320 = vpack.c.b16 %v276, %v275
    %v321 = vpack.c.b16 %v278, %v277
    %v322 = vpack.c.b16 %v280, %v279
    %v323 = vpack.c.b16 %v282, %v281
    %v324 = vpack.c.b16 %v284, %v283
    %v325 = vpack.c.b16 %v286, %v285
    %v326 = vpack.c.b16 %v288, %v287
    %v327 = vpack.c.b16 %v290, %v289
    %v328 = vpack.c.b16 %v292, %v291
    %v329 = vpack.c.b16 %v294, %v293
    %v330 = vpack.c.b16 %v296, %v295
    %v331 = vpack.c.b16 %v298, %v297
    %v332 = vpack.c.b16 %v300, %v299
    %365 = vmatpush.bf16.msra.mxu0 %v308
    %366 = vmatpush.bf16.msra.mxu0 %v307
    %367 = vmatpush.bf16.msra.mxu0 %v306
    %368 = vmatpush.bf16.msra.mxu0 %v305
    %369 = vmatpush.bf16.msra.mxu0 %v304
    %370 = vmatpush.bf16.msra.mxu0 %v303
    %371 = vmatpush.bf16.msra.mxu0 %v302
    %372 = vmatpush.bf16.msra.mxu0 %v301
    %373 = vmatmul.bf16.gmra.mxu0 %v41
    %v374 = vpop.f32.mrf.mxu0
    %v375 = vadd.f32 0.0, %v374
    %v376 = vpop.f32.mrf.mxu0
    %v377 = vadd.f32 0.0, %v376
    %378 = vdwg.mxu0
    %379 = vmatpush.bf16.msra.mxu0 %v316
    %380 = vmatpush.bf16.msra.mxu0 %v315
    %381 = vmatpush.bf16.msra.mxu0 %v314
    %382 = vmatpush.bf16.msra.mxu0 %v313
    %383 = vmatpush.bf16.msra.mxu0 %v312
    %384 = vmatpush.bf16.msra.mxu0 %v311
    %385 = vmatpush.bf16.msra.mxu0 %v310
    %386 = vmatpush.bf16.msra.mxu0 %v309
    %387 = vmatmul.bf16.gmra.mxu0 %v42
    %v388 = vpop.f32.mrf.mxu0
    %v389 = vadd.f32 %v375, %v388
    %v390 = vpop.f32.mrf.mxu0
    %v391 = vadd.f32 %v377, %v390
    %392 = vdwg.mxu0
    %393 = vmatpush.bf16.msra.mxu0 %v324
    %394 = vmatpush.bf16.msra.mxu0 %v323
    %395 = vmatpush.bf16.msra.mxu0 %v322
    %396 = vmatpush.bf16.msra.mxu0 %v321
    %397 = vmatpush.bf16.msra.mxu0 %v320
    %398 = vmatpush.bf16.msra.mxu0 %v319
    %399 = vmatpush.bf16.msra.mxu0 %v318
    %400 = vmatpush.bf16.msra.mxu0 %v317
    %401 = vmatmul.bf16.gmra.mxu0 %v43
    %v402 = vpop.f32.mrf.mxu0
    %v403 = vadd.f32 %v389, %v402
    %v404 = vpop.f32.mrf.mxu0
    %v405 = vadd.f32 %v391, %v404
    %406 = vdwg.mxu0
    %407 = vmatpush.bf16.msra.mxu0 %v332
    %408 = vmatpush.bf16.msra.mxu0 %v331
    %409 = vmatpush.bf16.msra.mxu0 %v330
    %410 = vmatpush.bf16.msra.mxu0 %v329
    %411 = vmatpush.bf16.msra.mxu0 %v328
    %412 = vmatpush.bf16.msra.mxu0 %v327
    %413 = vmatpush.bf16.msra.mxu0 %v326
    %414 = vmatpush.bf16.msra.mxu0 %v325
    %415 = vmatmul.bf16.gmra.mxu0 %v44
    %v416 = vpop.f32.mrf.mxu0
    %v417 = vadd.f32 %v403, %v416
    %v418 = vpop.f32.mrf.mxu0
    %v419 = vadd.f32 %v405, %v418
    %420 = vdwg.mxu0
    %v485 = vunpack.c.l.b16 %v45
    %v486 = vunpack.c.l.b16 %v46
    %v487 = vunpack.c.l.b16 %v47
    %v488 = vunpack.c.l.b16 %v48
    %v489 = vunpack.c.l.b16 %v49
    %v490 = vunpack.c.l.b16 %v50
    %v491 = vunpack.c.l.b16 %v51
    %v492 = vunpack.c.l.b16 %v52
    %v493 = vunpack.c.l.b16 %v53
    %v494 = vunpack.c.l.b16 %v54
    %v495 = vunpack.c.l.b16 %v55
    %v496 = vunpack.c.l.b16 %v56
    %v497 = vunpack.c.l.b16 %v57
    %v498 = vunpack.c.l.b16 %v58
    %v499 = vunpack.c.l.b16 %v59
    %v500 = vunpack.c.l.b16 %v60
    %v501 = vunpack.c.l.b16 %v61
    %v502 = vunpack.c.l.b16 %v62
    %v503 = vunpack.c.l.b16 %v63
    %v504 = vunpack.c.l.b16 %v64
    %v505 = vunpack.c.l.b16 %v65
    %v506 = vunpack.c.l.b16 %v66
    %v507 = vunpack.c.l.b16 %v67
    %v508 = vunpack.c.l.b16 %v68
    %v509 = vunpack.c.l.b16 %v69
    %v510 = vunpack.c.l.b16 %v70
    %v511 = vunpack.c.l.b16 %v71
    %v512 = vunpack.c.l.b16 %v72
    %v513 = vunpack.c.l.b16 %v73
    %v514 = vunpack.c.l.b16 %v74
    %v515 = vunpack.c.l.b16 %v75
    %v516 = vunpack.c.l.b16 %v76
    %v517 = vunpack.c.l.b16 %v77
    %v518 = vunpack.c.l.b16 %v78
    %v519 = vunpack.c.l.b16 %v79
    %v520 = vunpack.c.l.b16 %v80
    %v521 = vunpack.c.l.b16 %v81
    %v522 = vunpack.c.l.b16 %v82
    %v523 = vunpack.c.l.b16 %v83
    %v524 = vunpack.c.l.b16 %v84
    %v525 = vunpack.c.l.b16 %v85
    %v526 = vunpack.c.l.b16 %v86
    %v527 = vunpack.c.l.b16 %v87
    %v528 = vunpack.c.l.b16 %v88
    %v529 = vunpack.c.l.b16 %v89
    %v530 = vunpack.c.l.b16 %v90
    %v531 = vunpack.c.l.b16 %v91
    %v532 = vunpack.c.l.b16 %v92
    %v533 = vunpack.c.l.b16 %v93
    %v534 = vunpack.c.l.b16 %v94
    %v535 = vunpack.c.l.b16 %v95
    %v536 = vunpack.c.l.b16 %v96
    %v537 = vunpack.c.l.b16 %v97
    %v538 = vunpack.c.l.b16 %v98
    %v539 = vunpack.c.l.b16 %v99
    %v540 = vunpack.c.l.b16 %v100
    %v541 = vunpack.c.l.b16 %v101
    %v542 = vunpack.c.l.b16 %v102
    %v543 = vunpack.c.l.b16 %v103
    %v544 = vunpack.c.l.b16 %v104
    %v545 = vunpack.c.l.b16 %v105
    %v546 = vunpack.c.l.b16 %v106
    %v547 = vunpack.c.l.b16 %v107
    %v548 = vunpack.c.l.b16 %v108
    %v549 = vpack.c.b16 %v486, %v485
    %v550 = vpack.c.b16 %v488, %v487
    %v551 = vpack.c.b16 %v490, %v489
    %v552 = vpack.c.b16 %v492, %v491
    %v553 = vpack.c.b16 %v494, %v493
    %v554 = vpack.c.b16 %v496, %v495
    %v555 = vpack.c.b16 %v498, %v497
    %v556 = vpack.c.b16 %v500, %v499
    %v557 = vpack.c.b16 %v502, %v501
    %v558 = vpack.c.b16 %v504, %v503
    %v559 = vpack.c.b16 %v506, %v505
    %v560 = vpack.c.b16 %v508, %v507
    %v561 = vpack.c.b16 %v510, %v509
    %v562 = vpack.c.b16 %v512, %v511
    %v563 = vpack.c.b16 %v514, %v513
    %v564 = vpack.c.b16 %v516, %v515
    %v565 = vpack.c.b16 %v518, %v517
    %v566 = vpack.c.b16 %v520, %v519
    %v567 = vpack.c.b16 %v522, %v521
    %v568 = vpack.c.b16 %v524, %v523
    %v569 = vpack.c.b16 %v526, %v525
    %v570 = vpack.c.b16 %v528, %v527
    %v571 = vpack.c.b16 %v530, %v529
    %v572 = vpack.c.b16 %v532, %v531
    %v573 = vpack.c.b16 %v534, %v533
    %v574 = vpack.c.b16 %v536, %v535
    %v575 = vpack.c.b16 %v538, %v537
    %v576 = vpack.c.b16 %v540, %v539
    %v577 = vpack.c.b16 %v542, %v541
    %v578 = vpack.c.b16 %v544, %v543
    %v579 = vpack.c.b16 %v546, %v545
    %v580 = vpack.c.b16 %v548, %v547
    %613 = vmatpush.bf16.msra.mxu0 %v556
    %614 = vmatpush.bf16.msra.mxu0 %v555
    %615 = vmatpush.bf16.msra.mxu0 %v554
    %616 = vmatpush.bf16.msra.mxu0 %v553
    %617 = vmatpush.bf16.msra.mxu0 %v552
    %618 = vmatpush.bf16.msra.mxu0 %v551
    %619 = vmatpush.bf16.msra.mxu0 %v550
    %620 = vmatpush.bf16.msra.mxu0 %v549
    %621 = vmatmul.bf16.gmra.mxu0 %v29
    %v622 = vpop.f32.mrf.mxu0
    %v623 = vadd.f32 %v417, %v622
    %v624 = vpop.f32.mrf.mxu0
    %v625 = vadd.f32 %v419, %v624
    %626 = vdwg.mxu0
    %627 = vmatpush.bf16.msra.mxu0 %v564
    %628 = vmatpush.bf16.msra.mxu0 %v563
    %629 = vmatpush.bf16.msra.mxu0 %v562
    %630 = vmatpush.bf16.msra.mxu0 %v561
    %631 = vmatpush.bf16.msra.mxu0 %v560
    %632 = vmatpush.bf16.msra.mxu0 %v559
    %633 = vmatpush.bf16.msra.mxu0 %v558
    %634 = vmatpush.bf16.msra.mxu0 %v557
    %635 = vmatmul.bf16.gmra.mxu0 %v30
    %v636 = vpop.f32.mrf.mxu0
    %v637 = vadd.f32 %v623, %v636
    %v638 = vpop.f32.mrf.mxu0
    %v639 = vadd.f32 %v625, %v638
    %640 = vdwg.mxu0
    %641 = vmatpush.bf16.msra.mxu0 %v572
    %642 = vmatpush.bf16.msra.mxu0 %v571
    %643 = vmatpush.bf16.msra.mxu0 %v570
    %644 = vmatpush.bf16.msra.mxu0 %v569
    %645 = vmatpush.bf16.msra.mxu0 %v568
    %646 = vmatpush.bf16.msra.mxu0 %v567
    %647 = vmatpush.bf16.msra.mxu0 %v566
    %648 = vmatpush.bf16.msra.mxu0 %v565
    %649 = vmatmul.bf16.gmra.mxu0 %v31
    %v650 = vpop.f32.mrf.mxu0
    %v651 = vadd.f32 %v637, %v650
    %v652 = vpop.f32.mrf.mxu0
    %v653 = vadd.f32 %v639, %v652
    %654 = vdwg.mxu0
    %655 = vmatpush.bf16.msra.mxu0 %v580
    %656 = vmatpush.bf16.msra.mxu0 %v579
    %657 = vmatpush.bf16.msra.mxu0 %v578
    %658 = vmatpush.bf16.msra.mxu0 %v577
    %659 = vmatpush.bf16.msra.mxu0 %v576
    %660 = vmatpush.bf16.msra.mxu0 %v575
    %661 = vmatpush.bf16.msra.mxu0 %v574
    %662 = vmatpush.bf16.msra.mxu0 %v573
    %663 = vmatmul.bf16.gmra.mxu0 %v32
    %v664 = vpop.f32.mrf.mxu0
    %v665 = vadd.f32 %v651, %v664
    %v666 = vpop.f32.mrf.mxu0
    %v667 = vadd.f32 %v653, %v666
    %668 = vdwg.mxu0
    %v669 = vld [vmem:[%s4] sm:$0x1]
    %v671 = vperm.slane %v669, 0
    %v673 = vadd.f32 %v665, %v671
    %v674 = vadd.f32 %v667, %v671
    %vm675 = vcmask 523264
    %676 = vst.msk [vmem:[#allocation2] sm:$0xff] %vm675, %v673
    %677 = vst.msk [vmem:[#allocation2 + $0x8] sm:$0xff] %vm675, %v674
    // Predicated region
    $region22: #{tpu_custom_call.1} parent=1 // pred_check
      _
    $region23: #{tpu_custom_call.1} parent=1 // pred_check_branch
      %679 = sbr.rel (0) target = $region25
    $region24: #{tpu_custom_call.1} parent=1 // pred_region
      %681 = vsyncadd [#allocation3], 0
      %s682 = sshll.u32 [#allocation2], 4
      %s683 = int_to_ptr.vmem [resolvable:$true] %s682
      %s684 = sshll.u32 %s5, 4
      %s685 = int_to_ptr.hbm [resolvable:$true] %s684
      %690 = dma.vmem_to_hbm [thread:$0]  %s683, 256, %s685, [#allocation3], 128, 128, 8
    $region25: #{tpu_custom_call.1} parent=1 // pred_fallthru
      _
    // Predicated region
    $region26: #{tpu_custom_call.1} parent=1 // pred_check
      _
    $region27: #{tpu_custom_call.1} parent=1 // pred_check_branch
      %692 = sbr.rel (0) target = $region29
    $region28: #{tpu_custom_call.1} parent=1 // pred_region
      %694 = dma.done [#allocation3], 256
    $region29: #{tpu_custom_call.1} parent=1 // pred_fallthru
      _
    %695 = vsyncpa [#allocation3], 1

</llo_original>
